<compile_context>
chip_gen: v6e
topology: v6e:2x2x1
jax: 0.10.0
libtpu: 0.0.40
codegen_flags: <defaults>
</compile_context>

<pallas_src>
import jax
import jax.numpy as jnp
from jax.experimental import pallas as pl
from jax.experimental.pallas import tpu as pltpu

_LANES = 128
# 1024 rows x 128 lanes x 4 B = 512 KiB per f32 block; with 2 input + 2 output
# pipeline buffers that is 2 MiB total -- comfortably inside v5e's 16 MiB
# scoped VMEM default and v7x's 64 MiB physical VMEM.
_MAX_TILE_ROWS = 1024


def _sublane_multiple(dtype) -> int:
    """Minimum second-to-last-dim tile multiple for this dtype (f32->8,
    bf16->16, int8->32)."""
    itemsize = jnp.dtype(dtype).itemsize
    return max(8, 32 // max(itemsize, 1))


def _identity_kernel(x_ref, o_ref):
    # Pure pass-through: the "forward" of BaseModel defines no computation.
    o_ref[...] = x_ref[...]


@jax.jit
def base_model_forward(x: jax.Array) -> jax.Array:
    """Stand-in for BaseModel.forward(): bit-exact identity on the input."""
    orig_shape = x.shape
    total = x.size
    sub = _sublane_multiple(x.dtype)

    # Lane-dense flatten: make the last dim exactly 128 lanes when possible.
    # NCHW is contiguous, so this reshape is free layout plumbing.
    if total % _LANES == 0:
        rows, cols = total // _LANES, _LANES
    else:
        # Fallback: keep the original trailing dim (full-extent block is
        # always legal even if not a 128 multiple).
        rows, cols = total // orig_shape[-1], orig_shape[-1]
    x2d = x.reshape(rows, cols)

    # Tile the row axis so software pipelining (double-buffered DMA) kicks in
    # for large tensors; 1024 is a multiple of every dtype's sublane quantum.
    if rows <= _MAX_TILE_ROWS:
        tile_rows = rows                      # full extent (always legal)
    else:
        tile_rows = _MAX_TILE_ROWS            # divisible by `sub` (<=32)
        assert tile_rows % sub == 0
    grid = (pl.cdiv(rows, tile_rows),)

    out2d = pl.pallas_call(
        _identity_kernel,
        out_shape=jax.ShapeDtypeStruct((rows, cols), x2d.dtype),
        grid_spec=pltpu.PrefetchScalarGridSpec(
            num_scalar_prefetch=0,
            grid=grid,
            in_specs=[pl.BlockSpec((tile_rows, cols), lambda i: (i, 0))],
            out_specs=pl.BlockSpec((tile_rows, cols), lambda i: (i, 0)),
        ),
        compiler_params=pltpu.CompilerParams(
            dimension_semantics=("parallel",),
        ),
        # Identity: donate the input buffer as the output (no extra HBM
        # allocation for the result).
        input_output_aliases={0: 0},
    )(x2d)

    return out2d.reshape(orig_shape)


if __name__ == "__main__":
    key = jax.random.PRNGKey(0)
    # Small representative shape (batch=2, channels=4, spatial=16x16).
    x = jax.random.normal(key, (2, 4, 16, 16), dtype=jnp.float32)

    y = base_model_forward(x)
    y = jax.block_until_ready(y)

    assert y.shape == x.shape
    assert y.dtype == x.dtype
    assert jnp.array_equal(y, x), "identity kernel mismatch"

    print("KERNEL_OK")
</pallas_src>

<mosaic_0001>
module attributes {stable_mosaic.version = 11 : i64} {
  func.func @_identity_kernel(%arg0: i32, %arg1: memref<16x128xf32, #tpu.memory_space<vmem>>, %arg2: memref<16x128xf32, #tpu.memory_space<vmem>>) attributes {dimension_semantics = [#tpu.dimension_semantics<parallel>], iteration_bounds = array<i64: 1>, scalar_prefetch = 0 : i64, scratch_operands = 0 : i64, tpu.core_type = #tpu.core_type<tc>, window_params = [{transform_indices = @transform_0, window_bounds = array<i64: 16, 128>}, {transform_indices = @transform_1, window_bounds = array<i64: 16, 128>}]} {
    %c0 = arith.constant 0 : index
    %c0_0 = arith.constant 0 : index
    %0 = vector.load %arg1[%c0, %c0_0] : memref<16x128xf32, #tpu.memory_space<vmem>>, vector<16x128xf32>
    %c0_1 = arith.constant 0 : index
    %c0_2 = arith.constant 0 : index
    %1 = vector.load %arg2[%c0_1, %c0_2] : memref<16x128xf32, #tpu.memory_space<vmem>>, vector<16x128xf32>
    tpu.vector_store %arg2[%c0_1, %c0_2], %0 {strides = array<i32>} : memref<16x128xf32, #tpu.memory_space<vmem>>, vector<16x128xf32>,
    return
  }
  func.func @transform_0(%arg0: i32) -> (i32, i32) {
    %c0_i32 = arith.constant 0 : i32
    %c0_i32_0 = arith.constant 0 : i32
    return %arg0, %c0_i32 : i32, i32
  }
  func.func @transform_1(%arg0: i32) -> (i32, i32) {
    %c0_i32 = arith.constant 0 : i32
    %c0_i32_0 = arith.constant 0 : i32
    return %arg0, %c0_i32 : i32, i32
  }
}

</mosaic_0001>

<llo_original>
// kernel: base_model_forward.1
$region0: #{base_model_forward.1}
  #allocation0 [shape = 'u32[]', space=smem, size = 0x4, offset = 0x4, fixed_abs, tag = 'smem constant byte address 0x4 - core index']
  #allocation1 [shape = 'u32[144,128]{1,0:T(1,128)}', space=vmem, size = 0x12000, scoped, tag = 'internal scratch']
  %s0 = inlined_call_operand.vmem [shape: f32[16,128], index: 0, kind: input, shape index: {}, may-alias: {0,1}]
  %s1 = inlined_call_operand.vmem [shape: f32[16,128], index: 1, kind: output, shape index: {}, may-alias: {0,1}]
  %s2 = sld [smem:[#allocation0]]
  $region14: #{base_model_forward.1} parent=0
    _
  %s4 = ssub.s32 1, %s2
  %s5 = scalar_select 0, %s4, %s2
  // Predicated region
  $region2: #{base_model_forward.1} parent=0 // pred_check
    _
  $region3: #{base_model_forward.1} parent=0 // pred_check_branch
    %7 = sbr.rel (0) target = $region5
  $region4: #{base_model_forward.1} parent=0 // pred_region
    _
  $region5: #{base_model_forward.1} parent=0 // pred_fallthru
    _
  %v8 = vld [vmem:[%s0] sm:$0xff]
  %v9 = vld [vmem:[%s0 + $0x8] sm:$0xff]
  %10 = vst [vmem:[%s1] sm:$0xff] %v8
  %11 = vst [vmem:[%s1 + $0x8] sm:$0xff] %v9
  // Predicated region
  $region6: #{base_model_forward.1} parent=0 // pred_check
    _
  $region7: #{base_model_forward.1} parent=0 // pred_check_branch
    %13 = sbr.rel (0) target = $region9
  $region8: #{base_model_forward.1} parent=0 // pred_region
    _
  $region9: #{base_model_forward.1} parent=0 // pred_fallthru
    _
  // Predicated region
  $region10: #{base_model_forward.1} parent=0 // pred_check
    _
  $region11: #{base_model_forward.1} parent=0 // pred_check_branch
    %15 = sbr.rel (0) target = $region13
  $region12: #{base_model_forward.1} parent=0 // pred_region
    _
  $region13: #{base_model_forward.1} parent=0 // pred_fallthru
    _

</llo_original>
